<compile_context>
chip_gen: v5e
topology: v5e:2x2
jax: 0.10.0
libtpu: 0.0.40
codegen_flags: <defaults>
</compile_context>

<pallas_src>
import functools

import jax
import jax.numpy as jnp
from jax.experimental import pallas as pl
from jax.experimental.pallas import tpu as pltpu

IGNORE_INDEX = -100
ALPHA = 0.5          # train_config.DISTILLATION_ALPHA (synthetic, deterministic)
TEMPERATURE = 2.0    # train_config.DISTILLATION_TEMP  (synthetic, deterministic)


def _small_int_power(t):
    """Return T as a small positive int if T is (numerically) one of 1..4, else None."""
    ti = int(round(t))
    if abs(t - ti) < 1e-6 and 1 <= ti <= 4:
        return ti
    return None


def _distill_kernel(*refs, temperature, n_rows, compute_ce, compute_kl):
    """One row tile: per-tile partial sums of CE, KL(T) and the valid-row count."""
    if compute_kl:
        s_ref, t_ref, lbl_ref, out_ref = refs
    else:
        s_ref, lbl_ref, out_ref = refs
        t_ref = None

    x = s_ref[...].astype(jnp.float32)           # (R, V) student logits, f32 in VMEM
    lbl = lbl_ref[...]                           # (R, 1) int32 labels
    R, V = x.shape

    # Row-validity mask for the ragged tail (grid = cdiv(N, R); tail rows are garbage).
    # Mask is applied per-row BEFORE any tile-wide reduction so NaN/Inf in padded rows
    # cannot poison the partial sums.
    row_ids = pl.program_id(0) * R + jax.lax.broadcasted_iota(jnp.int32, (R, 1), 0)
    valid = (lbl != IGNORE_INDEX) & (row_ids < n_rows)            # (R, 1) bool

    inv_t = 1.0 / temperature
    m = jnp.max(x, axis=-1, keepdims=True)       # (R, 1); max(x/T) == max(x)/T for T > 0
    xm = x - m                                   # (R, V) shared by CE gather and KL

    ce_sum = jnp.float32(0.0)
    kl_sum = jnp.float32(0.0)

    e_s = None
    sum_s = None
    if compute_kl:
        # Single student exp pass at the distillation temperature.
        e_s = jnp.exp(xm * inv_t)                                 # (R, V)
        sum_s = jnp.sum(e_s, axis=-1, keepdims=True)              # (R, 1)

    if compute_ce:
        # CE partition function: reuse e_s via an integer power when possible
        # (exp(xm) == e_s**T), keeping full-vocab exp passes at <= 2 per tile.
        p = _small_int_power(temperature)
        if compute_kl and p is not None:
            e1 = e_s
            for _ in range(p - 1):
                e1 = e1 * e_s                                     # VALU, not EUP
        else:
            e1 = jnp.exp(xm)
        log_s1 = jnp.log(jnp.sum(e1, axis=-1, keepdims=True))     # (R, 1) = lse - m

        vocab_iota = jax.lax.broadcasted_iota(jnp.int32, (R, V), 1)
        safe_lbl = jnp.where(valid, lbl, 0)                       # keep one-hot in range
        onehot = (vocab_iota == safe_lbl).astype(jnp.float32)
        picked_xm = jnp.sum(onehot * xm, axis=-1, keepdims=True)  # x[lbl] - m
        ce_row = jnp.where(valid, log_s1 - picked_xm, 0.0)        # (R, 1)
        ce_sum = jnp.sum(ce_row)

    if compute_kl:
        # KL(teacher_T || student_T), log_target=False, summed over vocab, with the
        # log-ratio folded:  t_logp - s_logp = (t - x)*inv_t + c_row,
        #   c_row = (m - mt)*inv_t + log(sum_s) - log(sum_t)
        # so kl_row = inv_t * sum(e_t * (t - x)) / sum_t + c_row  (no t_p / t_logp /
        # s_logp materialized; exact division on an (R,1) scalar).
        t = t_ref[...].astype(jnp.float32)                        # (R, V) teacher logits
        mt = jnp.max(t, axis=-1, keepdims=True)                   # (R, 1)
        e_t = jnp.exp((t - mt) * inv_t)                           # (R, V)  2nd (& last) exp
        sum_t = jnp.sum(e_t, axis=-1, keepdims=True)              # (R, 1)
        cross = jnp.sum(e_t * (t - x), axis=-1, keepdims=True)    # (R, 1)
        c_row = (m - mt) * inv_t + jnp.log(sum_s) - jnp.log(sum_t)
        kl_row = inv_t * cross / sum_t + c_row                    # (R, 1)
        kl_row = jnp.where(valid, kl_row, 0.0)
        kl_sum = jnp.sum(kl_row)

    cnt = jnp.sum(valid.astype(jnp.float32))

    # Per-tile partials packed into one lane-dense 128-wide row (unmasked vst).
    lane = jax.lax.broadcasted_iota(jnp.int32, (1, 1, 128), 2)
    out_ref[...] = jnp.where(lane == 0, ce_sum,
                   jnp.where(lane == 1, kl_sum,
                   jnp.where(lane == 2, cnt, 0.0)))


def _vmem_capacity_bytes():
    """Per-core VMEM capacity; per-generation fallback if the query is unavailable."""
    try:
        info = pltpu.get_tpu_info()
        cap = getattr(info, "vmem_capacity_bytes", None)
        if cap:
            return int(cap)
    except Exception:
        pass
    try:
        kind = jax.devices()[0].device_kind.lower()
        if "v7" in kind:
            return 64 * 1024 * 1024    # v7x: 64 MiB per TensorCore
    except Exception:
        pass
    return 128 * 1024 * 1024           # v5e / v6e: 128 MiB


def _choose_tile_rows(n_rows, vocab, in_itemsize, vmem_cap, num_streams):
    """Largest row tile keeping (streams x 2 pipeline bufs + ~3 f32 temps) in budget."""
    budget = min(int(vmem_cap * 0.55), 60 * 1024 * 1024)
    # num_streams inputs x double buffer (native dtype) + ~3 tile-sized f32 temporaries.
    per_row = 2 * num_streams * vocab * in_itemsize + 12 * vocab
    tr = max(int(budget // max(per_row, 1)), 8)
    tr = max((tr // 16) * 16, 8)          # sublane-friendly (bf16 packs 16 rows / vreg)
    tr = min(tr, 1024)
    n_ceil = ((n_rows + 7) // 8) * 8
    return max(8, min(tr, n_ceil))


def distillation_loss(student_logits, teacher_logits, labels,
                      alpha=ALPHA, temperature=TEMPERATURE, tile_rows=None):
    """Mirror of DistillationLoss.forward (teacher forward replaced by teacher_logits).

    student_logits / teacher_logits: (B, S, V); labels: (B, S) int with -100 ignored.
    Returns (total_loss, {'total_loss', 'loss_ce', 'loss_kl'}).
    """
    alpha = float(alpha)
    temperature = float(temperature)
    B, S, V = student_logits.shape

    compute_ce = alpha < 1.0
    compute_kl = (teacher_logits is not None) and (alpha > 0.0)

    if compute_kl:
        # Seq-len truncation to the common length (the module does this for the KL branch).
        S_min = min(S, teacher_logits.shape[1])
        student_logits = student_logits[:, :S_min, :]
        teacher_logits = teacher_logits[:, :S_min, :]
        labels = labels[:, :S_min]
    else:
        S_min = S

    N = B * S_min
    s_flat = student_logits.reshape(N, V)       # native dtype: no wrapper-side f32 cast
    l_flat = labels.reshape(N, 1).astype(jnp.int32)

    num_streams = 2 if compute_kl else 1
    itemsize = jnp.dtype(s_flat.dtype).itemsize
    if compute_kl:
        itemsize = max(itemsize, jnp.dtype(teacher_logits.dtype).itemsize)

    vmem_cap = _vmem_capacity_bytes()
    if tile_rows is None:
        tile_rows = _choose_tile_rows(N, V, itemsize, vmem_cap, num_streams)
    num_tiles = pl.cdiv(N, tile_rows)           # ragged tail handled by in-kernel mask

    logit_spec = pl.BlockSpec((tile_rows, V), lambda i: (i, 0))
    # TODO(synk): on v5e, if xprof shows exposed DMA at step boundaries, add
    #             pipeline_mode=pl.Buffered(3) to the logit in_specs.
    inputs = [s_flat]
    in_specs = [logit_spec]
    if compute_kl:
        inputs.append(teacher_logits.reshape(N, V))
        in_specs.append(logit_spec)
    inputs.append(l_flat)
    in_specs.append(pl.BlockSpec((tile_rows, 1), lambda i: (i, 0)))

    kernel = functools.partial(
        _distill_kernel,
        temperature=temperature,
        n_rows=N,
        compute_ce=compute_ce,
        compute_kl=compute_kl,
    )

    partials = pl.pallas_call(
        kernel,
        out_shape=jax.ShapeDtypeStruct((num_tiles, 1, 128), jnp.float32),
        grid_spec=pltpu.PrefetchScalarGridSpec(
            num_scalar_prefetch=0,
            grid=(num_tiles,),
            in_specs=in_specs,
            out_specs=pl.BlockSpec((1, 1, 128), lambda i: (i, 0, 0)),
        ),
        compiler_params=pltpu.CompilerParams(
            # "parallel" lets the single grid axis shard across the 2 TCs on v7x
            # (num_tiles is normally >> 2 at real batch/seq sizes).
            dimension_semantics=("parallel",),
            vmem_limit_bytes=int(min(vmem_cap * 3 // 4, 100 * 1024 * 1024)),
        ),
    )(*inputs)

    ce_sum = jnp.sum(partials[:, 0, 0])
    kl_sum = jnp.sum(partials[:, 0, 1])
    num_active = jnp.sum(partials[:, 0, 2])
    safe_n = jnp.maximum(num_active, 1.0)

    if compute_ce:
        loss_ce = jnp.where(num_active > 0, ce_sum / safe_n, 0.0)
        loss_ce = jnp.where(jnp.isfinite(loss_ce), loss_ce, 0.0)   # module's NaN/Inf guard
    else:
        loss_ce = jnp.float32(0.0)

    if compute_kl:
        loss_kl = jnp.where(num_active > 0, (temperature ** 2) * kl_sum / safe_n, 0.0)
        loss_kl = jnp.where(jnp.isfinite(loss_kl), loss_kl, 0.0)   # module's NaN/Inf guard
    else:
        loss_kl = jnp.float32(0.0)

    total = alpha * loss_kl + (1.0 - alpha) * loss_ce
    return total, {"total_loss": total, "loss_ce": loss_ce, "loss_kl": loss_kl}


if __name__ == "__main__":
    key = jax.random.PRNGKey(0)
    k1, k2, k3, k4 = jax.random.split(key, 4)

    B, S, V = 2, 8, 128  # small shapes; vocab is lane-sized (multiple of 128)

    # Native bf16 logits: the kernel streams them as-is and casts per-tile in VMEM.
    student_logits = jax.random.normal(k1, (B, S, V), dtype=jnp.bfloat16)
    teacher_logits = jax.random.normal(k2, (B, S, V), dtype=jnp.bfloat16)

    labels = jax.random.randint(k3, (B, S), 0, V, dtype=jnp.int32)
    # mark some positions as ignored (-100), like HF padding labels
    ignore_mask = jax.random.bernoulli(k4, p=0.25, shape=(B, S))
    labels = jnp.where(ignore_mask, IGNORE_INDEX, labels)

    total, loss_dict = distillation_loss(student_logits, teacher_logits, labels)
    jax.block_until_ready(total)
    jax.block_until_ready(loss_dict["loss_ce"])
    jax.block_until_ready(loss_dict["loss_kl"])

    print("KERNEL_OK")
</pallas_src>

<mosaic_0001>
module attributes {stable_mosaic.version = 11 : i64} {
  func.func @_distill_kernel(%arg0: i32, %arg1: memref<16x128xbf16, #tpu.memory_space<vmem>>, %arg2: memref<16x128xbf16, #tpu.memory_space<vmem>>, %arg3: memref<16x1xi32, #tpu.memory_space<vmem>>, %arg4: memref<1x1x128xf32, #tpu.memory_space<vmem>>) attributes {dimension_semantics = [#tpu.dimension_semantics<parallel>], iteration_bounds = array<i64: 1>, scalar_prefetch = 0 : i64, scratch_operands = 0 : i64, tpu.core_type = #tpu.core_type<tc>, window_params = [{transform_indices = @transform_0, window_bounds = array<i64: 16, 128>}, {transform_indices = @transform_1, window_bounds = array<i64: 16, 128>}, {transform_indices = @transform_2, window_bounds = array<i64: 16, 1>}, {transform_indices = @transform_3, window_bounds = array<i64: 1, 1, 128>}]} {
    %c0 = arith.constant 0 : index
    %c0_0 = arith.constant 0 : index
    %0 = vector.load %arg1[%c0, %c0_0] : memref<16x128xbf16, #tpu.memory_space<vmem>>, vector<16x128xbf16>
    %1 = arith.extf %0 : vector<16x128xbf16> to vector<16x128xf32>
    %c0_1 = arith.constant 0 : index
    %c0_2 = arith.constant 0 : index
    %2 = vector.load %arg3[%c0_1, %c0_2] : memref<16x1xi32, #tpu.memory_space<vmem>>, vector<16x1xi32>
    %c16_i32 = arith.constant 16 : i32
    %3 = arith.muli %arg0, %c16_i32 : i32
    %4 = tpu.iota {dimensions = array<i32: 0>} : vector<16x1xi32>
    %5 = vector.broadcast %3 : i32 to vector<16x1xi32>
    %6 = arith.addi %5, %4 : vector<16x1xi32>
    %c-100_i32 = arith.constant -100 : i32
    %7 = vector.broadcast %c-100_i32 : i32 to vector<16x1xi32>
    %8 = arith.cmpi ne, %2, %7 : vector<16x1xi32>
    %c16_i32_3 = arith.constant 16 : i32
    %9 = vector.broadcast %c16_i32_3 : i32 to vector<16x1xi32>
    %10 = arith.cmpi slt, %6, %9 : vector<16x1xi32>
    %11 = arith.andi %8, %10 : vector<16x1xi1>
    %cst = arith.constant dense<0xFF800000> : vector<16xf32>
    %12 = vector.multi_reduction <maximumf>, %1, %cst [1] : vector<16x128xf32> to vector<16xf32>
    %13 = vector.shape_cast %12 : vector<16xf32> to vector<16x1xf32>
    %14 = vector.broadcast %13 : vector<16x1xf32> to vector<16x128xf32>
    %15 = arith.subf %1, %14 : vector<16x128xf32>
    %cst_4 = arith.constant 5.000000e-01 : f32
    %16 = vector.broadcast %cst_4 : f32 to vector<16x128xf32>
    %17 = arith.mulf %15, %16 : vector<16x128xf32>
    %18 = math.exp %17 : vector<16x128xf32>
    %cst_5 = arith.constant dense<0.000000e+00> : vector<16xf32>
    %19 = vector.multi_reduction <add>, %18, %cst_5 [1] : vector<16x128xf32> to vector<16xf32>
    %20 = vector.shape_cast %19 : vector<16xf32> to vector<16x1xf32>
    %21 = arith.mulf %18, %18 : vector<16x128xf32>
    %cst_6 = arith.constant dense<0.000000e+00> : vector<16xf32>
    %22 = vector.multi_reduction <add>, %21, %cst_6 [1] : vector<16x128xf32> to vector<16xf32>
    %23 = vector.shape_cast %22 : vector<16xf32> to vector<16x1xf32>
    %24 = math.log %23 : vector<16x1xf32>
    %25 = tpu.iota {dimensions = array<i32: 1>} : vector<16x128xi32>
    %c0_i32 = arith.constant 0 : i32
    %26 = vector.broadcast %c0_i32 : i32 to vector<16x1xi32>
    %27 = arith.select %11, %2, %26 : vector<16x1xi1>, vector<16x1xi32>
    %28 = vector.broadcast %27 : vector<16x1xi32> to vector<16x128xi32>
    %29 = arith.cmpi eq, %25, %28 : vector<16x128xi32>
    %30 = arith.extui %29 : vector<16x128xi1> to vector<16x128xi32>
    %31 = arith.sitofp %30 : vector<16x128xi32> to vector<16x128xf32>
    %32 = arith.mulf %31, %15 : vector<16x128xf32>
    %cst_7 = arith.constant dense<0.000000e+00> : vector<16xf32>
    %33 = vector.multi_reduction <add>, %32, %cst_7 [1] : vector<16x128xf32> to vector<16xf32>
    %34 = vector.shape_cast %33 : vector<16xf32> to vector<16x1xf32>
    %35 = arith.subf %24, %34 : vector<16x1xf32>
    %cst_8 = arith.constant 0.000000e+00 : f32
    %36 = vector.broadcast %cst_8 : f32 to vector<16x1xf32>
    %37 = arith.select %11, %35, %36 : vector<16x1xi1>, vector<16x1xf32>
    %38 = vector.shape_cast %37 : vector<16x1xf32> to vector<1x16x1xf32>
    %cst_9 = arith.constant dense<0.000000e+00> : vector<1xf32>
    %39 = vector.multi_reduction <add>, %38, %cst_9 [1, 2] : vector<1x16x1xf32> to vector<1xf32>
    %40 = vector.shape_cast %39 : vector<1xf32> to vector<1x1x1xf32>
    %41 = vector.extract %40[0, 0, 0] : f32 from vector<1x1x1xf32>
    %c0_10 = arith.constant 0 : index
    %c0_11 = arith.constant 0 : index
    %42 = vector.load %arg2[%c0_10, %c0_11] : memref<16x128xbf16, #tpu.memory_space<vmem>>, vector<16x128xbf16>
    %43 = arith.extf %42 : vector<16x128xbf16> to vector<16x128xf32>
    %cst_12 = arith.constant dense<0xFF800000> : vector<16xf32>
    %44 = vector.multi_reduction <maximumf>, %43, %cst_12 [1] : vector<16x128xf32> to vector<16xf32>
    %45 = vector.shape_cast %44 : vector<16xf32> to vector<16x1xf32>
    %46 = vector.broadcast %45 : vector<16x1xf32> to vector<16x128xf32>
    %47 = arith.subf %43, %46 : vector<16x128xf32>
    %cst_13 = arith.constant 5.000000e-01 : f32
    %48 = vector.broadcast %cst_13 : f32 to vector<16x128xf32>
    %49 = arith.mulf %47, %48 : vector<16x128xf32>
    %50 = math.exp %49 : vector<16x128xf32>
    %cst_14 = arith.constant dense<0.000000e+00> : vector<16xf32>
    %51 = vector.multi_reduction <add>, %50, %cst_14 [1] : vector<16x128xf32> to vector<16xf32>
    %52 = vector.shape_cast %51 : vector<16xf32> to vector<16x1xf32>
    %53 = arith.subf %43, %1 : vector<16x128xf32>
    %54 = arith.mulf %50, %53 : vector<16x128xf32>
    %cst_15 = arith.constant dense<0.000000e+00> : vector<16xf32>
    %55 = vector.multi_reduction <add>, %54, %cst_15 [1] : vector<16x128xf32> to vector<16xf32>
    %56 = vector.shape_cast %55 : vector<16xf32> to vector<16x1xf32>
    %57 = arith.subf %13, %45 : vector<16x1xf32>
    %cst_16 = arith.constant 5.000000e-01 : f32
    %58 = vector.broadcast %cst_16 : f32 to vector<16x1xf32>
    %59 = arith.mulf %57, %58 : vector<16x1xf32>
    %60 = math.log %20 : vector<16x1xf32>
    %61 = arith.addf %59, %60 : vector<16x1xf32>
    %62 = math.log %52 : vector<16x1xf32>
    %63 = arith.subf %61, %62 : vector<16x1xf32>
    %cst_17 = arith.constant 5.000000e-01 : f32
    %64 = vector.broadcast %cst_17 : f32 to vector<16x1xf32>
    %65 = arith.mulf %64, %56 : vector<16x1xf32>
    %66 = arith.divf %65, %52 : vector<16x1xf32>
    %67 = arith.addf %66, %63 : vector<16x1xf32>
    %cst_18 = arith.constant 0.000000e+00 : f32
    %68 = vector.broadcast %cst_18 : f32 to vector<16x1xf32>
    %69 = arith.select %11, %67, %68 : vector<16x1xi1>, vector<16x1xf32>
    %70 = vector.shape_cast %69 : vector<16x1xf32> to vector<1x16x1xf32>
    %cst_19 = arith.constant dense<0.000000e+00> : vector<1xf32>
    %71 = vector.multi_reduction <add>, %70, %cst_19 [1, 2] : vector<1x16x1xf32> to vector<1xf32>
    %72 = vector.shape_cast %71 : vector<1xf32> to vector<1x1x1xf32>
    %73 = vector.extract %72[0, 0, 0] : f32 from vector<1x1x1xf32>
    %74 = arith.extui %11 : vector<16x1xi1> to vector<16x1xi32>
    %75 = arith.sitofp %74 : vector<16x1xi32> to vector<16x1xf32>
    %76 = vector.shape_cast %75 : vector<16x1xf32> to vector<1x16x1xf32>
    %cst_20 = arith.constant dense<0.000000e+00> : vector<1xf32>
    %77 = vector.multi_reduction <add>, %76, %cst_20 [1, 2] : vector<1x16x1xf32> to vector<1xf32>
    %78 = vector.shape_cast %77 : vector<1xf32> to vector<1x1x1xf32>
    %79 = vector.extract %78[0, 0, 0] : f32 from vector<1x1x1xf32>
    %80 = tpu.iota {dimensions = array<i32: 2>} : vector<1x1x128xi32>
    %c0_i32_21 = arith.constant 0 : i32
    %81 = vector.broadcast %c0_i32_21 : i32 to vector<1x1x128xi32>
    %82 = arith.cmpi eq, %80, %81 : vector<1x1x128xi32>
    %c1_i32 = arith.constant 1 : i32
    %83 = vector.broadcast %c1_i32 : i32 to vector<1x1x128xi32>
    %84 = arith.cmpi eq, %80, %83 : vector<1x1x128xi32>
    %c2_i32 = arith.constant 2 : i32
    %85 = vector.broadcast %c2_i32 : i32 to vector<1x1x128xi32>
    %86 = arith.cmpi eq, %80, %85 : vector<1x1x128xi32>
    %cst_22 = arith.constant 0.000000e+00 : f32
    %87 = vector.broadcast %79 : f32 to vector<1x1x128xf32>
    %88 = vector.broadcast %cst_22 : f32 to vector<1x1x128xf32>
    %89 = arith.select %86, %87, %88 : vector<1x1x128xi1>, vector<1x1x128xf32>
    %90 = vector.broadcast %73 : f32 to vector<1x1x128xf32>
    %91 = arith.select %84, %90, %89 : vector<1x1x128xi1>, vector<1x1x128xf32>
    %92 = vector.broadcast %41 : f32 to vector<1x1x128xf32>
    %93 = arith.select %82, %92, %91 : vector<1x1x128xi1>, vector<1x1x128xf32>
    %c0_23 = arith.constant 0 : index
    %c0_24 = arith.constant 0 : index
    %c0_25 = arith.constant 0 : index
    %94 = vector.load %arg4[%c0_23, %c0_24, %c0_25] : memref<1x1x128xf32, #tpu.memory_space<vmem>>, vector<1x1x128xf32>
    tpu.vector_store %arg4[%c0_23, %c0_24, %c0_25], %93 {strides = array<i32>} : memref<1x1x128xf32, #tpu.memory_space<vmem>>, vector<1x1x128xf32>,
    return
  }
  func.func @transform_0(%arg0: i32) -> (i32, i32) {
    %c0_i32 = arith.constant 0 : i32
    %c0_i32_0 = arith.constant 0 : i32
    return %arg0, %c0_i32 : i32, i32
  }
  func.func @transform_1(%arg0: i32) -> (i32, i32) {
    %c0_i32 = arith.constant 0 : i32
    %c0_i32_0 = arith.constant 0 : i32
    return %arg0, %c0_i32 : i32, i32
  }
  func.func @transform_2(%arg0: i32) -> (i32, i32) {
    %c0_i32 = arith.constant 0 : i32
    %c0_i32_0 = arith.constant 0 : i32
    return %arg0, %c0_i32 : i32, i32
  }
  func.func @transform_3(%arg0: i32) -> (i32, i32, i32) {
    %c0_i32 = arith.constant 0 : i32
    %c0_i32_0 = arith.constant 0 : i32
    %c0_i32_1 = arith.constant 0 : i32
    return %arg0, %c0_i32, %c0_i32_0 : i32, i32, i32
  }
}

</mosaic_0001>

<llo_original>
// kernel: tpu_custom_call.1
$region0: #{tpu_custom_call.1}
  #allocation0 [shape = 'u32[]', space=smem, size = 0x4, offset = 0x4, fixed_abs, tag = 'smem constant byte address 0x4 - core index']
  #allocation1 [shape = 'u32[72,128]{1,0:T(1,128)}', space=vmem, size = 0x9000, scoped, tag = 'internal scratch']
  %s0 = inlined_call_operand.vmem [shape: bf16[16,128], index: 0, kind: input, shape index: {}]
  %s1 = inlined_call_operand.vmem [shape: bf16[16,128], index: 1, kind: input, shape index: {}]
  %s2 = inlined_call_operand.vmem [shape: s32[16,1], index: 2, kind: input, shape index: {}]
  %s3 = inlined_call_operand.hbm [shape: f32[1,1,128], index: 3, kind: output, shape index: {}]
  %s4 = sld [smem:[#allocation0]]
  $region22: #{tpu_custom_call.1} parent=0
    _
  %s6 = ssub.s32 1, %s4
  %s7 = scalar_select 0, %s6, %s4
  $region1: #{tpu_custom_call.1} parent=0
    #allocation2 [shape = 'u8[512]{0}', space=vmem, size = 0x400, scoped, tag = 'output window, operand 0, single buffered']
    #allocation3 [shape = 's32[1]{0}', space=sflag, size = 0x4, scoped, tag = 'scoped memory for tpu_custom_call.1']
    %8 = vsyncpa [#allocation3], 0
    // Predicated region
    $region2: #{tpu_custom_call.1} parent=1 // pred_check
      _
    $region3: #{tpu_custom_call.1} parent=1 // pred_check_branch
      %10 = sbr.rel (0) target = $region5
    $region4: #{tpu_custom_call.1} parent=1 // pred_region
      _
    $region5: #{tpu_custom_call.1} parent=1 // pred_fallthru
      _
    // Predicated region
    $region6: #{tpu_custom_call.1} parent=1 // pred_check
      _
    $region7: #{tpu_custom_call.1} parent=1 // pred_check_branch
      %12 = sbr.rel (0) target = $region9
    $region8: #{tpu_custom_call.1} parent=1 // pred_region
      _
    $region9: #{tpu_custom_call.1} parent=1 // pred_fallthru
      _
    // Predicated region
    $region10: #{tpu_custom_call.1} parent=1 // pred_check
      _
    $region11: #{tpu_custom_call.1} parent=1 // pred_check_branch
      %14 = sbr.rel (0) target = $region13
    $region12: #{tpu_custom_call.1} parent=1 // pred_region
      _
    $region13: #{tpu_custom_call.1} parent=1 // pred_fallthru
      _
    %v15 = vld [vmem:[%s0] sm:$0xf]
    %v16 = vld [vmem:[%s0 + $0x4] sm:$0xf]
    %v17 = vunpack.c.l.bf16 %v15
    %v18 = vunpack.c.l.bf16 %v16
    %v19 = vld [vmem:[%s2] sm:$0xff]
    %v20 = vld [vmem:[%s2 + $0x8] sm:$0xff]
    %s21 = smul.u32 0, 16
    %v22 = vlaneseq
    %v23 = vshrl.u32 %v22, 7
    %v24 = vadd.s32 %v23, 8
    %v25 = vstv %s21
    %v26 = vadd.s32 %v25, %v23
    %v27 = vadd.s32 %v25, %v24
    %vm28 = vcmp.ne.s32.totalorder %v19, 4294967196
    %vm29 = vcmp.ne.s32.totalorder %v20, 4294967196
    %vm30 = vcmp.lt.s32.totalorder %v26, 16
    %vm31 = vcmp.lt.s32.totalorder %v27, 16
    %vm32 = vmand %vm28, %vm30
    %vm33 = vmand %vm29, %vm31
    %34 = vmax.xlane.f32.xlu0 %v17
    %v35 = vpop.xlane.xlu0 %34
    %36 = vmax.xlane.f32.xlu0 %v18
    %v37 = vpop.xlane.xlu0 %36
    %v38 = vsub.f32 %v17, %v35
    %v39 = vsub.f32 %v18, %v37
    %v40 = vmul.f32 %v38, 0.5
    %v41 = vmul.f32 %v39, 0.5
    %v42 = vmul.f32 %v40, 1.442695
    %v43 = vpow.pop %v42
    %v44 = vmul.f32 %v41, 1.442695
    %v45 = vpow.pop %v44
    %46 = vadd.xlane.f32.xlu0 %v43
    %v47 = vpop.xlane.xlu0 %46
    %48 = vadd.xlane.f32.xlu0 %v45
    %v49 = vpop.xlane.xlu0 %48
    %v50 = vmul.f32 %v43, %v43
    %v51 = vmul.f32 %v45, %v45
    %52 = vadd.xlane.f32.xlu0 %v50
    %v53 = vpop.xlane.xlu0 %52
    %54 = vadd.xlane.f32.xlu0 %v51
    %v55 = vpop.xlane.xlu0 %54
    %v56 = vlog2.pop %v53
    %v57 = vmul.f32 %v56, 0.6931472
    %v58 = vlog2.pop %v55
    %v59 = vmul.f32 %v58, 0.6931472
    %v60 = vlaneseq
    %v61 = vand.u32 %v60, 127
    %v62 = vsel %vm32, %v19, 0
    %v63 = vsel %vm33, %v20, 0
    %64 = vset.pattern.permute.xlu0 0
    %65 = vperm.xlu0 %64, %v62
    %v66 = vpop.permute.xlu0 %65
    %67 = vset.pattern.permute.xlu0 0
    %68 = vperm.xlu0 %67, %v63
    %v69 = vpop.permute.xlu0 %68
    %vm70 = vcmp.eq.s32.totalorder %v61, %v66
    %vm71 = vcmp.eq.s32.totalorder %v61, %v69
    %v72 = vsel %vm70, 1, 0
    %v73 = vsel %vm71, 1, 0
    %v74 = vcvt.s32.f32 %v72
    %v75 = vcvt.s32.f32 %v73
    %v76 = vmul.f32 %v74, %v38
    %v77 = vmul.f32 %v75, %v39
    %78 = vadd.xlane.f32.xlu0 %v76
    %v79 = vpop.xlane.xlu0 %78
    %80 = vadd.xlane.f32.xlu0 %v77
    %v81 = vpop.xlane.xlu0 %80
    %v82 = vsub.f32 %v57, %v79
    %v83 = vsub.f32 %v59, %v81
    %v84 = vsel %vm32, %v82, 0.0
    %v85 = vsel %vm33, %v83, 0.0
    %vm86 = vcmask 7168
    %v87 = vsel %vm86, %v84, 0.0
    %v88 = vsel %vm86, %v85, 0.0
    %v89 = vadd.f32 %v87, %v88
    %90 = vadd.xlane.f32.xlu0 %v89
    %v91 = vpop.xlane.xlu0 %90
    %v92 = vrot.slane %v91, 4
    %v93 = vadd.f32 %v91, %v92
    %v94 = vrot.slane %v93, 2
    %v95 = vadd.f32 %v93, %v94
    %v96 = vrot.slane %v95, 1
    %v97 = vadd.f32 %v95, %v96
    %s98 = vtos %v97
    %v99 = vld [vmem:[%s1] sm:$0xf]
    %v100 = vld [vmem:[%s1 + $0x4] sm:$0xf]
    %v101 = vunpack.c.l.bf16 %v99
    %v102 = vunpack.c.l.bf16 %v100
    %103 = vmax.xlane.f32.xlu0 %v101
    %v104 = vpop.xlane.xlu0 %103
    %105 = vmax.xlane.f32.xlu0 %v102
    %v106 = vpop.xlane.xlu0 %105
    %v107 = vsub.f32 %v101, %v104
    %v108 = vsub.f32 %v102, %v106
    %v109 = vmul.f32 %v107, 0.5
    %v110 = vmul.f32 %v108, 0.5
    %v111 = vmul.f32 %v109, 1.442695
    %v112 = vpow.pop %v111
    %v113 = vmul.f32 %v110, 1.442695
    %v114 = vpow.pop %v113
    %115 = vadd.xlane.f32.xlu0 %v112
    %v116 = vpop.xlane.xlu0 %115
    %117 = vadd.xlane.f32.xlu0 %v114
    %v118 = vpop.xlane.xlu0 %117
    %v119 = vsub.f32 %v101, %v17
    %v120 = vsub.f32 %v102, %v18
    %v121 = vmul.f32 %v112, %v119
    %v122 = vmul.f32 %v114, %v120
    %123 = vadd.xlane.f32.xlu0 %v121
    %v124 = vpop.xlane.xlu0 %123
    %125 = vadd.xlane.f32.xlu0 %v122
    %v126 = vpop.xlane.xlu0 %125
    %v127 = vsub.f32 %v35, %v104
    %v128 = vsub.f32 %v37, %v106
    %v129 = vmul.f32 %v127, 0.5
    %v130 = vmul.f32 %v128, 0.5
    %v131 = vlog2.pop %v47
    %v132 = vmul.f32 %v131, 0.6931472
    %v133 = vlog2.pop %v49
    %v134 = vmul.f32 %v133, 0.6931472
    %v135 = vadd.f32 %v129, %v132
    %v136 = vadd.f32 %v130, %v134
    %v137 = vlog2.pop %v116
    %v138 = vmul.f32 %v137, 0.6931472
    %v139 = vlog2.pop %v118
    %v140 = vmul.f32 %v139, 0.6931472
    %v141 = vsub.f32 %v135, %v138
    %v142 = vsub.f32 %v136, %v140
    %v143 = vmul.f32 %v124, 0.5
    %v144 = vmul.f32 %v126, 0.5
    %v145 = vrcp.pop %v116
    %v146 = vmul.f32 %v116, %v145
    %v147 = vsub.f32 1.0, %v146
    %v148 = vmul.f32 %v145, %v147
    %v149 = vadd.f32 %v145, %v148
    %vm150 = vweird.f32 %v116
    %vm151 = vweird.f32 %v145
    %vm152 = vmor %vm150, %vm151
    %v153 = vsel %vm152, %v145, %v149
    %v154 = vand.u32 2147483647, %v116
    %vm155 = vcmp.eq.f32.partialorder %v154, 8.507059e+37
    %v156 = vand.u32 %v116, 2147483648
    %v157 = vor.u32 1.1754944e-38, %v156
    %v158 = vsel %vm155, %v157, %v153
    %v159 = vmul.f32 %v143, %v158
    %v160 = vrcp.pop %v118
    %v161 = vmul.f32 %v118, %v160
    %v162 = vsub.f32 1.0, %v161
    %v163 = vmul.f32 %v160, %v162
    %v164 = vadd.f32 %v160, %v163
    %vm165 = vweird.f32 %v118
    %vm166 = vweird.f32 %v160
    %vm167 = vmor %vm165, %vm166
    %v168 = vsel %vm167, %v160, %v164
    %v169 = vand.u32 2147483647, %v118
    %vm170 = vcmp.eq.f32.partialorder %v169, 8.507059e+37
    %v171 = vand.u32 %v118, 2147483648
    %v172 = vor.u32 1.1754944e-38, %v171
    %v173 = vsel %vm170, %v172, %v168
    %v174 = vmul.f32 %v144, %v173
    %v175 = vadd.f32 %v159, %v141
    %v176 = vadd.f32 %v174, %v142
    %v177 = vsel %vm32, %v175, 0.0
    %v178 = vsel %vm33, %v176, 0.0
    %v179 = vsel %vm86, %v177, 0.0
    %v180 = vsel %vm86, %v178, 0.0
    %v181 = vadd.f32 %v179, %v180
    %182 = vadd.xlane.f32.xlu0 %v181
    %v183 = vpop.xlane.xlu0 %182
    %v184 = vrot.slane %v183, 4
    %v185 = vadd.f32 %v183, %v184
    %v186 = vrot.slane %v185, 2
    %v187 = vadd.f32 %v185, %v186
    %v188 = vrot.slane %v187, 1
    %v189 = vadd.f32 %v187, %v188
    %s190 = vtos %v189
    %v191 = vsel %vm32, 1, 0
    %v192 = vsel %vm33, 1, 0
    %v193 = vcvt.s32.f32 %v191
    %v194 = vcvt.s32.f32 %v192
    %v195 = vsel %vm86, %v193, 0.0
    %v196 = vsel %vm86, %v194, 0.0
    %v197 = vadd.f32 %v195, %v196
    %198 = vadd.xlane.f32.xlu0 %v197
    %v199 = vpop.xlane.xlu0 %198
    %v200 = vrot.slane %v199, 4
    %v201 = vadd.f32 %v199, %v200
    %v202 = vrot.slane %v201, 2
    %v203 = vadd.f32 %v201, %v202
    %v204 = vrot.slane %v203, 1
    %v205 = vadd.f32 %v203, %v204
    %s206 = vtos %v205
    %vm207 = vcmp.eq.s32.totalorder %v61, 0
    %vm208 = vcmp.eq.s32.totalorder %v61, 1
    %vm209 = vcmp.eq.s32.totalorder %v61, 2
    %v210 = vstv %s206
    %v211 = vsel %vm209, %v210, 0.0
    %v212 = vstv %s190
    %v213 = vsel %vm208, %v212, %v211
    %v214 = vstv %s98
    %v215 = vsel %vm207, %v214, %v213
    %216 = vst [vmem:[#allocation2] sm:$0x1] %v215
    // Predicated region
    $region14: #{tpu_custom_call.1} parent=1 // pred_check
      _
    $region15: #{tpu_custom_call.1} parent=1 // pred_check_branch
      %218 = sbr.rel (0) target = $region17
    $region16: #{tpu_custom_call.1} parent=1 // pred_region
      %220 = vsyncadd [#allocation3], 0
      %s222 = sshll.u32 [#allocation2], 4
      %s223 = int_to_ptr.vmem [resolvable:$true] %s222
      %s224 = sshll.u32 %s3, 4
      %s225 = int_to_ptr.hbm [resolvable:$true] %s224
      %227 = dma.vmem_to_hbm [thread:$0]  %s223, 16, %s225, [#allocation3]
    $region17: #{tpu_custom_call.1} parent=1 // pred_fallthru
      _
    // Predicated region
    $region18: #{tpu_custom_call.1} parent=1 // pred_check
      _
    $region19: #{tpu_custom_call.1} parent=1 // pred_check_branch
      %229 = sbr.rel (0) target = $region21
    $region20: #{tpu_custom_call.1} parent=1 // pred_region
      %231 = dma.done [#allocation3], 16
    $region21: #{tpu_custom_call.1} parent=1 // pred_fallthru
      _
    %232 = vsyncpa [#allocation3], 1

</llo_original>
